<compile_context>
chip_gen: v7x
topology: tpu7x:2x2x1
jax: 0.10.0
libtpu: 0.0.40
codegen_flags: <defaults>
</compile_context>

<pallas_src>
import functools

import jax
import jax.numpy as jnp
from jax import lax
from jax.experimental import pallas as pl
from jax.experimental.pallas import tpu as pltpu


def _mse_partial_kernel(pred_ref, truth_ref, out_ref, *, total_rows, needs_mask):
    """One grid step: TB batch rows -> (8, 128) lane-dense partial sum of sq. errors."""
    tb, n = pred_ref.shape               # (TB, N)
    c = truth_ref.shape[1] // n          # truth_ref: (TB, C*N)
    inv_c = jnp.float32(1.0 / c)

    row0 = pl.program_id(0) * tb         # first global row of this tile

    acc = jnp.zeros((8, 128), jnp.float32)
    for g in range(tb // 8):             # static unrolled: one sublane tile per group
        r0, r1 = g * 8, (g + 1) * 8
        p = pred_ref[r0:r1, :].astype(jnp.float32)                       # (8, N)

        # Channel sum via static, 128-aligned lane slices (pure VPU adds).
        t_sum = truth_ref[r0:r1, 0:n].astype(jnp.float32)
        for ch in range(1, c):
            t_sum = t_sum + truth_ref[r0:r1, ch * n:(ch + 1) * n].astype(jnp.float32)

        d = p - t_sum * inv_c                                            # (8, N)

        if needs_mask:
            # Ragged last tile: rows >= total_rows read unspecified data -> zero them.
            rid = row0 + g * 8 + lax.broadcasted_iota(jnp.int32, (8, n), 0)
            d = jnp.where(rid < total_rows, d, jnp.float32(0.0))

        sq = d * d
        # Fold onto the (8, 128) accumulator with static lane-aligned slice adds.
        for blk in range(n // 128):
            acc = acc + sq[:, blk * 128:(blk + 1) * 128]

    out_ref[0] = acc                     # lane-dense (8, 128) partial per tile


def my_loss(pred, truth, *, tb=None):
    """pred: (B, N), truth: (B, C, N) -> scalar f32 loss (global MSE vs channel mean)."""
    B, C, N = truth.shape
    assert pred.shape == (B, N), (pred.shape, (B, N))
    assert N % 128 == 0, "lane dim must be a multiple of 128 (spec forces N=2048)"

    # Free, layout-preserving flatten of the channel axis into lanes.
    truth_flat = truth.reshape(B, C * N)

    # --- tile-size selection ---------------------------------------------
    def _round_up8(x):
        return ((x + 7) // 8) * 8

    if tb is None:
        # Target 256 rows but guarantee >=2 tiles when B allows it, so the
        # "parallel" grid axis shards across both TensorCores on v7x.
        tb = min(256, _round_up8(max(pl.cdiv(B, 2), 1)))
    tb = max(8, (tb // 8) * 8)                       # enforce multiple of 8
    # Cap so double-buffered input blocks stay ~<=40 MiB (v7x has 64 MiB VMEM/TC).
    bytes_per_row = 4 * (N + C * N)
    cap = (40 * 1024 * 1024) // (2 * bytes_per_row)
    tb = max(8, min(tb, (cap // 8) * 8))

    num_tiles = pl.cdiv(B, tb)
    needs_mask = (B % tb) != 0                       # ragged last tile -> mask in-kernel

    kernel = functools.partial(
        _mse_partial_kernel, total_rows=B, needs_mask=needs_mask)

    partials = pl.pallas_call(
        kernel,
        out_shape=jax.ShapeDtypeStruct((num_tiles, 8, 128), jnp.float32),
        grid_spec=pltpu.PrefetchScalarGridSpec(
            num_scalar_prefetch=0,
            grid=(num_tiles,),
            in_specs=[
                pl.BlockSpec((tb, N), lambda i: (i, 0)),          # pred rows
                pl.BlockSpec((tb, C * N), lambda i: (i, 0)),      # truth rows, C in lanes
            ],
            out_specs=pl.BlockSpec((1, 8, 128), lambda i: (i, 0, 0)),
        ),
        compiler_params=pltpu.CompilerParams(
            dimension_semantics=("parallel",),       # independent tiles: both TCs on v7x
            vmem_limit_bytes=48 * 1024 * 1024,
        ),
    )(pred, truth_flat)

    # Tiny final reduce + scale by the true element count.
    return jnp.sum(partials) * jnp.float32(1.0 / (B * N))


if __name__ == "__main__":
    key = jax.random.PRNGKey(0)
    k1, k2 = jax.random.split(key)

    B, C, N = 2, 4, 2048                 # N=2048 is forced by view(-1, 2048)
    pred = jax.random.normal(k1, (B, N), dtype=jnp.float32)
    truth = jax.random.normal(k2, (B, C, N), dtype=jnp.float32)

    loss = my_loss(pred, truth)
    loss = jax.block_until_ready(loss)

    # pure-JAX reference check
    ref = jnp.mean(jnp.mean((pred - jnp.mean(truth, axis=1)) ** 2, axis=1), axis=0)
    assert jnp.allclose(loss, ref, rtol=1e-5, atol=1e-5), (loss, ref)

    print("KERNEL_OK")
</pallas_src>

<mosaic_0001>
module attributes {stable_mosaic.version = 11 : i64} {
  func.func @_mse_partial_kernel(%arg0: i32, %arg1: memref<8x2048xf32, #tpu.memory_space<vmem>>, %arg2: memref<8x8192xf32, #tpu.memory_space<vmem>>, %arg3: memref<1x8x128xf32, #tpu.memory_space<vmem>>) attributes {dimension_semantics = [#tpu.dimension_semantics<parallel>], iteration_bounds = array<i64: 1>, scalar_prefetch = 0 : i64, scratch_operands = 0 : i64, tpu.core_type = #tpu.core_type<tc>, window_params = [{transform_indices = @transform_0, window_bounds = array<i64: 8, 2048>}, {transform_indices = @transform_1, window_bounds = array<i64: 8, 8192>}, {transform_indices = @transform_2, window_bounds = array<i64: 1, 8, 128>}]} {
    %c8_i32 = arith.constant 8 : i32
    %0 = arith.muli %arg0, %c8_i32 : i32
    %cst = arith.constant 0.000000e+00 : f32
    %1 = vector.broadcast %cst : f32 to vector<8x128xf32>
    %c0 = arith.constant 0 : index
    %c0_0 = arith.constant 0 : index
    %2 = vector.load %arg1[%c0, %c0_0] : memref<8x2048xf32, #tpu.memory_space<vmem>>, vector<8x2048xf32>
    %c0_1 = arith.constant 0 : index
    %c0_2 = arith.constant 0 : index
    %3 = vector.load %arg2[%c0_1, %c0_2] : memref<8x8192xf32, #tpu.memory_space<vmem>>, vector<8x2048xf32>
    %c0_3 = arith.constant 0 : index
    %c2048 = arith.constant 2048 : index
    %4 = vector.load %arg2[%c0_3, %c2048] : memref<8x8192xf32, #tpu.memory_space<vmem>>, vector<8x2048xf32>
    %5 = arith.addf %3, %4 : vector<8x2048xf32>
    %c0_4 = arith.constant 0 : index
    %c4096 = arith.constant 4096 : index
    %6 = vector.load %arg2[%c0_4, %c4096] : memref<8x8192xf32, #tpu.memory_space<vmem>>, vector<8x2048xf32>
    %7 = arith.addf %5, %6 : vector<8x2048xf32>
    %c0_5 = arith.constant 0 : index
    %c6144 = arith.constant 6144 : index
    %8 = vector.load %arg2[%c0_5, %c6144] : memref<8x8192xf32, #tpu.memory_space<vmem>>, vector<8x2048xf32>
    %9 = arith.addf %7, %8 : vector<8x2048xf32>
    %cst_6 = arith.constant 2.500000e-01 : f32
    %10 = vector.broadcast %cst_6 : f32 to vector<8x2048xf32>
    %11 = arith.mulf %9, %10 : vector<8x2048xf32>
    %12 = arith.subf %2, %11 : vector<8x2048xf32>
    %c0_i32 = arith.constant 0 : i32
    %13 = arith.addi %0, %c0_i32 : i32
    %14 = tpu.iota {dimensions = array<i32: 0>} : vector<8x2048xi32>
    %15 = vector.broadcast %13 : i32 to vector<8x2048xi32>
    %16 = arith.addi %15, %14 : vector<8x2048xi32>
    %c2_i32 = arith.constant 2 : i32
    %17 = vector.broadcast %c2_i32 : i32 to vector<8x2048xi32>
    %18 = arith.cmpi slt, %16, %17 : vector<8x2048xi32>
    %cst_7 = arith.constant 0.000000e+00 : f32
    %19 = vector.broadcast %cst_7 : f32 to vector<8x2048xf32>
    %20 = arith.select %18, %12, %19 : vector<8x2048xi1>, vector<8x2048xf32>
    %21 = arith.mulf %20, %20 : vector<8x2048xf32>
    %22 = vector.extract_strided_slice %21 {offsets = [0, 0], sizes = [8, 128], strides = [1, 1]} : vector<8x2048xf32> to vector<8x128xf32>
    %23 = arith.addf %1, %22 : vector<8x128xf32>
    %24 = vector.extract_strided_slice %21 {offsets = [0, 128], sizes = [8, 128], strides = [1, 1]} : vector<8x2048xf32> to vector<8x128xf32>
    %25 = arith.addf %23, %24 : vector<8x128xf32>
    %26 = vector.extract_strided_slice %21 {offsets = [0, 256], sizes = [8, 128], strides = [1, 1]} : vector<8x2048xf32> to vector<8x128xf32>
    %27 = arith.addf %25, %26 : vector<8x128xf32>
    %28 = vector.extract_strided_slice %21 {offsets = [0, 384], sizes = [8, 128], strides = [1, 1]} : vector<8x2048xf32> to vector<8x128xf32>
    %29 = arith.addf %27, %28 : vector<8x128xf32>
    %30 = vector.extract_strided_slice %21 {offsets = [0, 512], sizes = [8, 128], strides = [1, 1]} : vector<8x2048xf32> to vector<8x128xf32>
    %31 = arith.addf %29, %30 : vector<8x128xf32>
    %32 = vector.extract_strided_slice %21 {offsets = [0, 640], sizes = [8, 128], strides = [1, 1]} : vector<8x2048xf32> to vector<8x128xf32>
    %33 = arith.addf %31, %32 : vector<8x128xf32>
    %34 = vector.extract_strided_slice %21 {offsets = [0, 768], sizes = [8, 128], strides = [1, 1]} : vector<8x2048xf32> to vector<8x128xf32>
    %35 = arith.addf %33, %34 : vector<8x128xf32>
    %36 = vector.extract_strided_slice %21 {offsets = [0, 896], sizes = [8, 128], strides = [1, 1]} : vector<8x2048xf32> to vector<8x128xf32>
    %37 = arith.addf %35, %36 : vector<8x128xf32>
    %38 = vector.extract_strided_slice %21 {offsets = [0, 1024], sizes = [8, 128], strides = [1, 1]} : vector<8x2048xf32> to vector<8x128xf32>
    %39 = arith.addf %37, %38 : vector<8x128xf32>
    %40 = vector.extract_strided_slice %21 {offsets = [0, 1152], sizes = [8, 128], strides = [1, 1]} : vector<8x2048xf32> to vector<8x128xf32>
    %41 = arith.addf %39, %40 : vector<8x128xf32>
    %42 = vector.extract_strided_slice %21 {offsets = [0, 1280], sizes = [8, 128], strides = [1, 1]} : vector<8x2048xf32> to vector<8x128xf32>
    %43 = arith.addf %41, %42 : vector<8x128xf32>
    %44 = vector.extract_strided_slice %21 {offsets = [0, 1408], sizes = [8, 128], strides = [1, 1]} : vector<8x2048xf32> to vector<8x128xf32>
    %45 = arith.addf %43, %44 : vector<8x128xf32>
    %46 = vector.extract_strided_slice %21 {offsets = [0, 1536], sizes = [8, 128], strides = [1, 1]} : vector<8x2048xf32> to vector<8x128xf32>
    %47 = arith.addf %45, %46 : vector<8x128xf32>
    %48 = vector.extract_strided_slice %21 {offsets = [0, 1664], sizes = [8, 128], strides = [1, 1]} : vector<8x2048xf32> to vector<8x128xf32>
    %49 = arith.addf %47, %48 : vector<8x128xf32>
    %50 = vector.extract_strided_slice %21 {offsets = [0, 1792], sizes = [8, 128], strides = [1, 1]} : vector<8x2048xf32> to vector<8x128xf32>
    %51 = arith.addf %49, %50 : vector<8x128xf32>
    %52 = vector.extract_strided_slice %21 {offsets = [0, 1920], sizes = [8, 128], strides = [1, 1]} : vector<8x2048xf32> to vector<8x128xf32>
    %53 = arith.addf %51, %52 : vector<8x128xf32>
    %c0_8 = arith.constant 0 : index
    %c0_9 = arith.constant 0 : index
    %c0_10 = arith.constant 0 : index
    %54 = vector.load %arg3[%c0_8, %c0_9, %c0_10] : memref<1x8x128xf32, #tpu.memory_space<vmem>>, vector<1x8x128xf32>
    %55 = vector.shape_cast %54 : vector<1x8x128xf32> to vector<8x128xf32>
    %56 = vector.shape_cast %53 : vector<8x128xf32> to vector<1x8x128xf32>
    tpu.vector_store %arg3[%c0_8, %c0_9, %c0_10], %56 {strides = array<i32>} : memref<1x8x128xf32, #tpu.memory_space<vmem>>, vector<1x8x128xf32>,
    return
  }
  func.func @transform_0(%arg0: i32) -> (i32, i32) {
    %c0_i32 = arith.constant 0 : i32
    %c0_i32_0 = arith.constant 0 : i32
    return %arg0, %c0_i32 : i32, i32
  }
  func.func @transform_1(%arg0: i32) -> (i32, i32) {
    %c0_i32 = arith.constant 0 : i32
    %c0_i32_0 = arith.constant 0 : i32
    return %arg0, %c0_i32 : i32, i32
  }
  func.func @transform_2(%arg0: i32) -> (i32, i32, i32) {
    %c0_i32 = arith.constant 0 : i32
    %c0_i32_0 = arith.constant 0 : i32
    %c0_i32_1 = arith.constant 0 : i32
    return %arg0, %c0_i32, %c0_i32_0 : i32, i32, i32
  }
}

</mosaic_0001>

<llo_original>
// kernel: tpu_custom_call.1
$region0: #{tpu_custom_call.1}
  #allocation0 [shape = 'u32[]', space=smem, size = 0x4, offset = 0x4, fixed_abs, tag = 'smem constant byte address 0x4 - core index']
  #allocation1 [shape = 'u32[144,128]{1,0:T(1,128)}', space=vmem, size = 0x12000, scoped, tag = 'internal scratch']
  %s0 = inlined_call_operand.hbm [shape: f32[2,2048], index: 0, kind: input, shape index: {}]
  %s1 = inlined_call_operand.hbm [shape: f32[2,8192], index: 1, kind: input, shape index: {}]
  %s2 = inlined_call_operand.hbm [shape: f32[1,8,128], index: 2, kind: output, shape index: {}]
  %s3 = sld [smem:[#allocation0]]
  $region26: #{tpu_custom_call.1} parent=0
    _
  %s5 = ssub.s32 1, %s3
  %s6 = scalar_select 0, %s5, %s3
  $region1: #{tpu_custom_call.1} parent=0
    #allocation2 [shape = 'u8[65536]{0}', space=vmem, size = 0x10000, scoped, tag = 'input window, operand 0, single buffered']
    #allocation3 [shape = 's32[1]{0}', space=sflag, size = 0x4, scoped, tag = 'scoped memory for tpu_custom_call.1']
    #allocation4 [shape = 's32[1]{0}', space=sflag, size = 0x4, scoped, tag = 'scoped memory for tpu_custom_call.1']
    #allocation5 [shape = 'u8[262144]{0}', space=vmem, size = 0x40000, scoped, tag = 'input window, operand 1, single buffered']
    #allocation6 [shape = 's32[1]{0}', space=sflag, size = 0x4, scoped, tag = 'scoped memory for tpu_custom_call.1']
    #allocation7 [shape = 'u8[4096]{0}', space=vmem, size = 0x1000, scoped, tag = 'output window, operand 0, single buffered']
    %7 = vsyncpa [#allocation3], 0
    %8 = vsyncpa [#allocation6], 0
    %9 = vsyncpa [#allocation4], 0
    // Predicated region
    $region2: #{tpu_custom_call.1} parent=1 // pred_check
      _
    $region3: #{tpu_custom_call.1} parent=1 // pred_check_branch
      %11 = sbr.rel (0) target = $region5
    $region4: #{tpu_custom_call.1} parent=1 // pred_region
      %s13 = ssub.s32 2048, 512
      %14 = vsyncadd [#allocation3], %s13
      %s15 = sshll.u32 [#allocation2], 4
      %s16 = int_to_ptr.vmem [resolvable:$true] %s15
      %21 = dma.hbm_to_vmem [thread:$0]  %s0, 512, %s16, [#allocation3], 512, 512, 32
    $region5: #{tpu_custom_call.1} parent=1 // pred_fallthru
      _
    // Predicated region
    $region6: #{tpu_custom_call.1} parent=1 // pred_check
      _
    $region7: #{tpu_custom_call.1} parent=1 // pred_check_branch
      %23 = sbr.rel (0) target = $region9
    $region8: #{tpu_custom_call.1} parent=1 // pred_region
      %s25 = ssub.s32 8192, 2048
      %26 = vsyncadd [#allocation6], %s25
      %s27 = sshll.u32 [#allocation5], 4
      %s28 = int_to_ptr.vmem [resolvable:$true] %s27
      %33 = dma.hbm_to_vmem [thread:$0]  %s1, 2048, %s28, [#allocation6], 2048, 2048, 128
    $region9: #{tpu_custom_call.1} parent=1 // pred_fallthru
      _
    // Predicated region
    $region10: #{tpu_custom_call.1} parent=1 // pred_check
      _
    $region11: #{tpu_custom_call.1} parent=1 // pred_check_branch
      %35 = sbr.rel (0) target = $region13
    $region12: #{tpu_custom_call.1} parent=1 // pred_region
      %36 = dma.done [#allocation3], 2048
    $region13: #{tpu_custom_call.1} parent=1 // pred_fallthru
      _
    // Predicated region
    $region14: #{tpu_custom_call.1} parent=1 // pred_check
      _
    $region15: #{tpu_custom_call.1} parent=1 // pred_check_branch
      %38 = sbr.rel (0) target = $region17
    $region16: #{tpu_custom_call.1} parent=1 // pred_region
      %39 = dma.done [#allocation6], 8192
    $region17: #{tpu_custom_call.1} parent=1 // pred_fallthru
      _
    %s40 = smul.u32 0, 8
    %v41 = vld [vmem:[#allocation2] sm:$0xff]
    %v42 = vld [vmem:[#allocation2 + $0x8] sm:$0xff]
    %v43 = vld [vmem:[#allocation2 + $0x10] sm:$0xff]
    %v44 = vld [vmem:[#allocation2 + $0x18] sm:$0xff]
    %v45 = vld [vmem:[#allocation2 + $0x20] sm:$0xff]
    %v46 = vld [vmem:[#allocation2 + $0x28] sm:$0xff]
    %v47 = vld [vmem:[#allocation2 + $0x30] sm:$0xff]
    %v48 = vld [vmem:[#allocation2 + $0x38] sm:$0xff]
    %v49 = vld [vmem:[#allocation2 + $0x40] sm:$0xff]
    %v50 = vld [vmem:[#allocation2 + $0x48] sm:$0xff]
    %v51 = vld [vmem:[#allocation2 + $0x50] sm:$0xff]
    %v52 = vld [vmem:[#allocation2 + $0x58] sm:$0xff]
    %v53 = vld [vmem:[#allocation2 + $0x60] sm:$0xff]
    %v54 = vld [vmem:[#allocation2 + $0x68] sm:$0xff]
    %v55 = vld [vmem:[#allocation2 + $0x70] sm:$0xff]
    %v56 = vld [vmem:[#allocation2 + $0x78] sm:$0xff]
    %v57 = vld [vmem:[#allocation5] sm:$0xff]
    %v58 = vld [vmem:[#allocation5 + $0x8] sm:$0xff]
    %v59 = vld [vmem:[#allocation5 + $0x10] sm:$0xff]
    %v60 = vld [vmem:[#allocation5 + $0x18] sm:$0xff]
    %v61 = vld [vmem:[#allocation5 + $0x80] sm:$0xff]
    %v62 = vld [vmem:[#allocation5 + $0x88] sm:$0xff]
    %v63 = vld [vmem:[#allocation5 + $0x90] sm:$0xff]
    %v64 = vld [vmem:[#allocation5 + $0x98] sm:$0xff]
    %v65 = vld [vmem:[#allocation5 + $0x100] sm:$0xff]
    %v66 = vld [vmem:[#allocation5 + $0x108] sm:$0xff]
    %v67 = vld [vmem:[#allocation5 + $0x110] sm:$0xff]
    %v68 = vld [vmem:[#allocation5 + $0x118] sm:$0xff]
    %v69 = vld [vmem:[#allocation5 + $0x180] sm:$0xff]
    %v70 = vld [vmem:[#allocation5 + $0x188] sm:$0xff]
    %v71 = vld [vmem:[#allocation5 + $0x190] sm:$0xff]
    %v72 = vld [vmem:[#allocation5 + $0x198] sm:$0xff]
    %v73 = vld [vmem:[#allocation5 + $0x20] sm:$0xff]
    %v74 = vld [vmem:[#allocation5 + $0x28] sm:$0xff]
    %v75 = vld [vmem:[#allocation5 + $0x30] sm:$0xff]
    %v76 = vld [vmem:[#allocation5 + $0x38] sm:$0xff]
    %v77 = vld [vmem:[#allocation5 + $0xa0] sm:$0xff]
    %v78 = vld [vmem:[#allocation5 + $0xa8] sm:$0xff]
    %v79 = vld [vmem:[#allocation5 + $0xb0] sm:$0xff]
    %v80 = vld [vmem:[#allocation5 + $0xb8] sm:$0xff]
    %v81 = vld [vmem:[#allocation5 + $0x120] sm:$0xff]
    %v82 = vld [vmem:[#allocation5 + $0x128] sm:$0xff]
    %v83 = vld [vmem:[#allocation5 + $0x130] sm:$0xff]
    %v84 = vld [vmem:[#allocation5 + $0x138] sm:$0xff]
    %v85 = vld [vmem:[#allocation5 + $0x1a0] sm:$0xff]
    %v86 = vld [vmem:[#allocation5 + $0x1a8] sm:$0xff]
    %v87 = vld [vmem:[#allocation5 + $0x1b0] sm:$0xff]
    %v88 = vld [vmem:[#allocation5 + $0x1b8] sm:$0xff]
    %v89 = vadd.f32 %v57, %v73
    %v90 = vadd.f32 %v58, %v74
    %v91 = vadd.f32 %v59, %v75
    %v92 = vadd.f32 %v60, %v76
    %v93 = vadd.f32 %v61, %v77
    %v94 = vadd.f32 %v62, %v78
    %v95 = vadd.f32 %v63, %v79
    %v96 = vadd.f32 %v64, %v80
    %v97 = vadd.f32 %v65, %v81
    %v98 = vadd.f32 %v66, %v82
    %v99 = vadd.f32 %v67, %v83
    %v100 = vadd.f32 %v68, %v84
    %v101 = vadd.f32 %v69, %v85
    %v102 = vadd.f32 %v70, %v86
    %v103 = vadd.f32 %v71, %v87
    %v104 = vadd.f32 %v72, %v88
    %v105 = vld [vmem:[#allocation5 + $0x40] sm:$0xff]
    %v106 = vld [vmem:[#allocation5 + $0x48] sm:$0xff]
    %v107 = vld [vmem:[#allocation5 + $0x50] sm:$0xff]
    %v108 = vld [vmem:[#allocation5 + $0x58] sm:$0xff]
    %v109 = vld [vmem:[#allocation5 + $0xc0] sm:$0xff]
    %v110 = vld [vmem:[#allocation5 + $0xc8] sm:$0xff]
    %v111 = vld [vmem:[#allocation5 + $0xd0] sm:$0xff]
    %v112 = vld [vmem:[#allocation5 + $0xd8] sm:$0xff]
    %v113 = vld [vmem:[#allocation5 + $0x140] sm:$0xff]
    %v114 = vld [vmem:[#allocation5 + $0x148] sm:$0xff]
    %v115 = vld [vmem:[#allocation5 + $0x150] sm:$0xff]
    %v116 = vld [vmem:[#allocation5 + $0x158] sm:$0xff]
    %v117 = vld [vmem:[#allocation5 + $0x1c0] sm:$0xff]
    %v118 = vld [vmem:[#allocation5 + $0x1c8] sm:$0xff]
    %v119 = vld [vmem:[#allocation5 + $0x1d0] sm:$0xff]
    %v120 = vld [vmem:[#allocation5 + $0x1d8] sm:$0xff]
    %v121 = vadd.f32 %v89, %v105
    %v122 = vadd.f32 %v90, %v106
    %v123 = vadd.f32 %v91, %v107
    %v124 = vadd.f32 %v92, %v108
    %v125 = vadd.f32 %v93, %v109
    %v126 = vadd.f32 %v94, %v110
    %v127 = vadd.f32 %v95, %v111
    %v128 = vadd.f32 %v96, %v112
    %v129 = vadd.f32 %v97, %v113
    %v130 = vadd.f32 %v98, %v114
    %v131 = vadd.f32 %v99, %v115
    %v132 = vadd.f32 %v100, %v116
    %v133 = vadd.f32 %v101, %v117
    %v134 = vadd.f32 %v102, %v118
    %v135 = vadd.f32 %v103, %v119
    %v136 = vadd.f32 %v104, %v120
    %v137 = vld [vmem:[#allocation5 + $0x60] sm:$0xff]
    %v138 = vld [vmem:[#allocation5 + $0x68] sm:$0xff]
    %v139 = vld [vmem:[#allocation5 + $0x70] sm:$0xff]
    %v140 = vld [vmem:[#allocation5 + $0x78] sm:$0xff]
    %v141 = vld [vmem:[#allocation5 + $0xe0] sm:$0xff]
    %v142 = vld [vmem:[#allocation5 + $0xe8] sm:$0xff]
    %v143 = vld [vmem:[#allocation5 + $0xf0] sm:$0xff]
    %v144 = vld [vmem:[#allocation5 + $0xf8] sm:$0xff]
    %v145 = vld [vmem:[#allocation5 + $0x160] sm:$0xff]
    %v146 = vld [vmem:[#allocation5 + $0x168] sm:$0xff]
    %v147 = vld [vmem:[#allocation5 + $0x170] sm:$0xff]
    %v148 = vld [vmem:[#allocation5 + $0x178] sm:$0xff]
    %v149 = vld [vmem:[#allocation5 + $0x1e0] sm:$0xff]
    %v150 = vld [vmem:[#allocation5 + $0x1e8] sm:$0xff]
    %v151 = vld [vmem:[#allocation5 + $0x1f0] sm:$0xff]
    %v152 = vld [vmem:[#allocation5 + $0x1f8] sm:$0xff]
    %v153 = vadd.f32 %v121, %v137
    %v154 = vadd.f32 %v122, %v138
    %v155 = vadd.f32 %v123, %v139
    %v156 = vadd.f32 %v124, %v140
    %v157 = vadd.f32 %v125, %v141
    %v158 = vadd.f32 %v126, %v142
    %v159 = vadd.f32 %v127, %v143
    %v160 = vadd.f32 %v128, %v144
    %v161 = vadd.f32 %v129, %v145
    %v162 = vadd.f32 %v130, %v146
    %v163 = vadd.f32 %v131, %v147
    %v164 = vadd.f32 %v132, %v148
    %v165 = vadd.f32 %v133, %v149
    %v166 = vadd.f32 %v134, %v150
    %v167 = vadd.f32 %v135, %v151
    %v168 = vadd.f32 %v136, %v152
    %v169 = vmul.f32 %v153, 0.25
    %v170 = vmul.f32 %v154, 0.25
    %v171 = vmul.f32 %v155, 0.25
    %v172 = vmul.f32 %v156, 0.25
    %v173 = vmul.f32 %v157, 0.25
    %v174 = vmul.f32 %v158, 0.25
    %v175 = vmul.f32 %v159, 0.25
    %v176 = vmul.f32 %v160, 0.25
    %v177 = vmul.f32 %v161, 0.25
    %v178 = vmul.f32 %v162, 0.25
    %v179 = vmul.f32 %v163, 0.25
    %v180 = vmul.f32 %v164, 0.25
    %v181 = vmul.f32 %v165, 0.25
    %v182 = vmul.f32 %v166, 0.25
    %v183 = vmul.f32 %v167, 0.25
    %v184 = vmul.f32 %v168, 0.25
    %v185 = vsub.f32 %v41, %v169
    %v186 = vsub.f32 %v42, %v170
    %v187 = vsub.f32 %v43, %v171
    %v188 = vsub.f32 %v44, %v172
    %v189 = vsub.f32 %v45, %v173
    %v190 = vsub.f32 %v46, %v174
    %v191 = vsub.f32 %v47, %v175
    %v192 = vsub.f32 %v48, %v176
    %v193 = vsub.f32 %v49, %v177
    %v194 = vsub.f32 %v50, %v178
    %v195 = vsub.f32 %v51, %v179
    %v196 = vsub.f32 %v52, %v180
    %v197 = vsub.f32 %v53, %v181
    %v198 = vsub.f32 %v54, %v182
    %v199 = vsub.f32 %v55, %v183
    %v200 = vsub.f32 %v56, %v184
    %v201 = vlaneseq
    %v202 = vshrl.u32 %v201, 7
    %v203 = vstv %s40
    %v204 = vadd.s32 %v203, %v202
    %vm205 = vcmp.lt.s32.totalorder %v204, 2
    %v222 = vcombine.low %v185, %v189
    %v223 = vcombine.high %v185, %v189
    %v224 = vcombine.low %v193, %v197
    %v225 = vcombine.high %v193, %v197
    %v227 = vunpack.c.l.s4 1983009808
    %v228 = vunpack.c.0.s8 %v227
    %v229 = vlaneseq
    %v230 = vshrl.u32 %v229, 7
    %v231 = vsub.s32 %v228, %v230
    %v232 = vrot.slane %v222, %v231
    %v234 = vunpack.c.l.s4 1983009808
    %v235 = vunpack.c.0.s8 %v234
    %v236 = vlaneseq
    %v237 = vshrl.u32 %v236, 7
    %v238 = vsub.s32 %v235, %v237
    %v239 = vrot.slane %v223, %v238
    %v241 = vunpack.c.l.s4 1983009808
    %v242 = vunpack.c.0.s8 %v241
    %v243 = vlaneseq
    %v244 = vshrl.u32 %v243, 7
    %v245 = vsub.s32 %v242, %v244
    %v246 = vrot.slane %v224, %v245
    %v248 = vunpack.c.l.s4 1983009808
    %v249 = vunpack.c.0.s8 %v248
    %v250 = vlaneseq
    %v251 = vshrl.u32 %v250, 7
    %v252 = vsub.s32 %v249, %v251
    %v253 = vrot.slane %v225, %v252
    %v254 = vcombine.low %v232, %v246
    %v255 = vcombine.high %v232, %v246
    %v256 = vcombine.low %v239, %v253
    %v257 = vcombine.high %v239, %v253
    %v258 = vcombine.low %v186, %v190
    %v259 = vcombine.high %v186, %v190
    %v260 = vcombine.low %v194, %v198
    %v261 = vcombine.high %v194, %v198
    %v263 = vunpack.c.l.s4 1983009808
    %v264 = vunpack.c.0.s8 %v263
    %v265 = vlaneseq
    %v266 = vshrl.u32 %v265, 7
    %v267 = vsub.s32 %v264, %v266
    %v268 = vrot.slane %v258, %v267
    %v270 = vunpack.c.l.s4 1983009808
    %v271 = vunpack.c.0.s8 %v270
    %v272 = vlaneseq
    %v273 = vshrl.u32 %v272, 7
    %v274 = vsub.s32 %v271, %v273
    %v275 = vrot.slane %v259, %v274
    %v277 = vunpack.c.l.s4 1983009808
    %v278 = vunpack.c.0.s8 %v277
    %v279 = vlaneseq
    %v280 = vshrl.u32 %v279, 7
    %v281 = vsub.s32 %v278, %v280
    %v282 = vrot.slane %v260, %v281
    %v284 = vunpack.c.l.s4 1983009808
    %v285 = vunpack.c.0.s8 %v284
    %v286 = vlaneseq
    %v287 = vshrl.u32 %v286, 7
    %v288 = vsub.s32 %v285, %v287
    %v289 = vrot.slane %v261, %v288
    %v290 = vcombine.low %v268, %v282
    %v291 = vcombine.high %v268, %v282
    %v292 = vcombine.low %v275, %v289
    %v293 = vcombine.high %v275, %v289
    %v294 = vcombine.low %v187, %v191
    %v295 = vcombine.high %v187, %v191
    %v296 = vcombine.low %v195, %v199
    %v297 = vcombine.high %v195, %v199
    %v299 = vunpack.c.l.s4 1983009808
    %v300 = vunpack.c.0.s8 %v299
    %v301 = vlaneseq
    %v302 = vshrl.u32 %v301, 7
    %v303 = vsub.s32 %v300, %v302
    %v304 = vrot.slane %v294, %v303
    %v306 = vunpack.c.l.s4 1983009808
    %v307 = vunpack.c.0.s8 %v306
    %v308 = vlaneseq
    %v309 = vshrl.u32 %v308, 7
    %v310 = vsub.s32 %v307, %v309
    %v311 = vrot.slane %v295, %v310
    %v313 = vunpack.c.l.s4 1983009808
    %v314 = vunpack.c.0.s8 %v313
    %v315 = vlaneseq
    %v316 = vshrl.u32 %v315, 7
    %v317 = vsub.s32 %v314, %v316
    %v318 = vrot.slane %v296, %v317
    %v320 = vunpack.c.l.s4 1983009808
    %v321 = vunpack.c.0.s8 %v320
    %v322 = vlaneseq
    %v323 = vshrl.u32 %v322, 7
    %v324 = vsub.s32 %v321, %v323
    %v325 = vrot.slane %v297, %v324
    %v326 = vcombine.low %v304, %v318
    %v327 = vcombine.high %v304, %v318
    %v328 = vcombine.low %v311, %v325
    %v329 = vcombine.high %v311, %v325
    %v330 = vcombine.low %v188, %v192
    %v331 = vcombine.high %v188, %v192
    %v332 = vcombine.low %v196, %v200
    %v333 = vcombine.high %v196, %v200
    %v335 = vunpack.c.l.s4 1983009808
    %v336 = vunpack.c.0.s8 %v335
    %v337 = vlaneseq
    %v338 = vshrl.u32 %v337, 7
    %v339 = vsub.s32 %v336, %v338
    %v340 = vrot.slane %v330, %v339
    %v342 = vunpack.c.l.s4 1983009808
    %v343 = vunpack.c.0.s8 %v342
    %v344 = vlaneseq
    %v345 = vshrl.u32 %v344, 7
    %v346 = vsub.s32 %v343, %v345
    %v347 = vrot.slane %v331, %v346
    %v349 = vunpack.c.l.s4 1983009808
    %v350 = vunpack.c.0.s8 %v349
    %v351 = vlaneseq
    %v352 = vshrl.u32 %v351, 7
    %v353 = vsub.s32 %v350, %v352
    %v354 = vrot.slane %v332, %v353
    %v356 = vunpack.c.l.s4 1983009808
    %v357 = vunpack.c.0.s8 %v356
    %v358 = vlaneseq
    %v359 = vshrl.u32 %v358, 7
    %v360 = vsub.s32 %v357, %v359
    %v361 = vrot.slane %v333, %v360
    %v362 = vcombine.low %v340, %v354
    %v363 = vcombine.high %v340, %v354
    %v364 = vcombine.low %v347, %v361
    %v365 = vcombine.high %v347, %v361
    %v382 = vsel %vm205, %v254, 0.0
    %v383 = vsel %vm205, %v255, 0.0
    %v384 = vsel %vm205, %v256, 0.0
    %v385 = vsel %vm205, %v257, 0.0
    %v386 = vsel %vm205, %v290, 0.0
    %v387 = vsel %vm205, %v291, 0.0
    %v388 = vsel %vm205, %v292, 0.0
    %v389 = vsel %vm205, %v293, 0.0
    %v390 = vsel %vm205, %v326, 0.0
    %v391 = vsel %vm205, %v327, 0.0
    %v392 = vsel %vm205, %v328, 0.0
    %v393 = vsel %vm205, %v329, 0.0
    %v394 = vsel %vm205, %v362, 0.0
    %v395 = vsel %vm205, %v363, 0.0
    %v396 = vsel %vm205, %v364, 0.0
    %v397 = vsel %vm205, %v365, 0.0
    %v398 = vmul.f32 %v382, %v382
    %v399 = vmul.f32 %v383, %v383
    %v400 = vmul.f32 %v384, %v384
    %v401 = vmul.f32 %v385, %v385
    %v402 = vmul.f32 %v386, %v386
    %v403 = vmul.f32 %v387, %v387
    %v404 = vmul.f32 %v388, %v388
    %v405 = vmul.f32 %v389, %v389
    %v406 = vmul.f32 %v390, %v390
    %v407 = vmul.f32 %v391, %v391
    %v408 = vmul.f32 %v392, %v392
    %v409 = vmul.f32 %v393, %v393
    %v410 = vmul.f32 %v394, %v394
    %v411 = vmul.f32 %v395, %v395
    %v412 = vmul.f32 %v396, %v396
    %v413 = vmul.f32 %v397, %v397
    %v414 = vadd.f32 %v398, 0.0
    %v415 = vadd.f32 %v414, %v399
    %v416 = vadd.f32 %v415, %v400
    %v417 = vadd.f32 %v416, %v401
    %v418 = vadd.f32 %v417, %v402
    %v419 = vadd.f32 %v418, %v403
    %v420 = vadd.f32 %v419, %v404
    %v421 = vadd.f32 %v420, %v405
    %v422 = vadd.f32 %v421, %v406
    %v423 = vadd.f32 %v422, %v407
    %v424 = vadd.f32 %v423, %v408
    %v425 = vadd.f32 %v424, %v409
    %v426 = vadd.f32 %v425, %v410
    %v427 = vadd.f32 %v426, %v411
    %v428 = vadd.f32 %v427, %v412
    %v429 = vadd.f32 %v428, %v413
    %430 = vst [vmem:[#allocation7] sm:$0xff] %v429
    // Predicated region
    $region18: #{tpu_custom_call.1} parent=1 // pred_check
      _
    $region19: #{tpu_custom_call.1} parent=1 // pred_check_branch
      %432 = sbr.rel (0) target = $region21
    $region20: #{tpu_custom_call.1} parent=1 // pred_region
      %s434 = ssub.s32 128, 128
      %435 = vsyncadd [#allocation4], %s434
      %s437 = sshll.u32 [#allocation7], 4
      %s438 = int_to_ptr.vmem [resolvable:$true] %s437
      %440 = dma.vmem_to_hbm [thread:$0]  %s438, 128, %s2, [#allocation4]
    $region21: #{tpu_custom_call.1} parent=1 // pred_fallthru
      _
    // Predicated region
    $region22: #{tpu_custom_call.1} parent=1 // pred_check
      _
    $region23: #{tpu_custom_call.1} parent=1 // pred_check_branch
      %442 = sbr.rel (0) target = $region25
    $region24: #{tpu_custom_call.1} parent=1 // pred_region
      %443 = dma.done [#allocation4], 128
    $region25: #{tpu_custom_call.1} parent=1 // pred_fallthru
      _
    %444 = vsyncpa [#allocation3], 1
    %445 = vsyncpa [#allocation6], 1
    %446 = vsyncpa [#allocation4], 1

</llo_original>
